<compile_context>
chip_gen: v5e
topology: v5e:2x2
jax: 0.10.0
libtpu: 0.0.40
codegen_flags: <defaults>
</compile_context>

<pallas_src>
import functools

import jax
import jax.numpy as jnp
from jax import lax
from jax.experimental import pallas as pl
from jax.experimental.pallas import tpu as pltpu


def gated_conv1d_kernel(x_ref, w_ref, b_ref, out_ref, carry_ref, *, c_out, t_tile):
    # Reset the causal carry (the implicit left zero-padding) at the first time
    # tile of every batch element. Time is the innermost ("arbitrary") axis.
    @pl.when(pl.program_id(1) == 0)
    def _():
        carry_ref[...] = jnp.zeros_like(carry_ref)

    xb = x_ref[0]                                           # (C_in, T_tile)   = x[t]
    ext = jnp.concatenate([carry_ref[...], xb], axis=-1)    # (C_in, d + T_tile)
    xa = ext[:, :t_tile]                                    # x[t - d] (zeros for t < d)
    carry_ref[...] = ext[:, t_tile:]                        # last d steps -> next tile

    # One fused MXU matmul covering both gates and both conv taps.
    x_stack = jnp.concatenate([xa, xb], axis=0)             # (2*C_in, T_tile)
    fg = jnp.dot(w_ref[...], x_stack.astype(w_ref.dtype),
                 preferred_element_type=jnp.float32)
    fg = fg + b_ref[...]                                    # packed bias, broadcast over lanes
    f = fg[:c_out]
    g = fg[c_out:]
    out_ref[0] = (jnp.tanh(f) * jax.nn.sigmoid(g)).astype(out_ref.dtype)


def _pick_t_tile(T):
    for cand in (512, 256, 128):
        if T % cand == 0:
            return cand
    return T  # small / odd T: single full-length tile


def gated_conv1d(x, wf, bf, wg, bg, dilation, *, t_tile=None,
                 compute_dtype=jnp.float32):
    """GatedConv1d.forward (label=None path).

    x: (B, C_in, T) float32, PyTorch NCT layout.
    wf, wg: (C_out, C_in, 2) Conv1d weights (kernel_size=2, stride=1, groups=1).
    bf, bg: (C_out,) biases.
    Returns tanh(conv_f(pad(x, [d, 0]))) * sigmoid(conv_g(pad(x, [d, 0]))),
    shape (B, C_out, T).
    """
    # TODO(synk): global-conditioning path (label != None with f/g Linear
    # projections) and general kernel_size/stride/groups are not implemented;
    # this covers the WaveNet usage (kernel_size=2, stride=1, groups=1).
    B, C_in, T = x.shape
    C_out = wf.shape[0]
    d = int(dilation)
    assert d >= 1
    assert wf.shape == (C_out, C_in, 2) and wg.shape == (C_out, C_in, 2)

    if t_tile is None:
        t_tile = _pick_t_tile(T)
    assert T % t_tile == 0, "time tile must divide T"
    nt = T // t_tile

    # Fuse gates and taps into one weight matrix:
    #   rows [0, C_out) -> f, rows [C_out, 2*C_out) -> g
    #   cols [0, C_in)  -> tap x[t-d] (kernel index 0), cols [C_in, 2*C_in) -> x[t]
    w_f = jnp.concatenate([wf[:, :, 0], wf[:, :, 1]], axis=1)            # (C_out, 2*C_in)
    w_g = jnp.concatenate([wg[:, :, 0], wg[:, :, 1]], axis=1)
    w_fused = jnp.concatenate([w_f, w_g], axis=0).astype(compute_dtype)  # (2*C_out, 2*C_in)
    b_fused = jnp.concatenate([bf, bg]).astype(jnp.float32)[:, None]     # (2*C_out, 1)

    kernel = functools.partial(gated_conv1d_kernel, c_out=C_out, t_tile=t_tile)

    out = pl.pallas_call(
        kernel,
        out_shape=jax.ShapeDtypeStruct((B, C_out, T), jnp.float32),
        grid_spec=pltpu.PrefetchScalarGridSpec(
            num_scalar_prefetch=0,
            grid=(B, nt),
            in_specs=[
                pl.BlockSpec((1, C_in, t_tile), lambda b, t: (b, 0, t)),   # x (read once)
                pl.BlockSpec((2 * C_out, 2 * C_in), lambda b, t: (0, 0)),  # fused weights
                pl.BlockSpec((2 * C_out, 1), lambda b, t: (0, 0)),         # packed biases
            ],
            out_specs=pl.BlockSpec((1, C_out, t_tile), lambda b, t: (b, 0, t)),
            scratch_shapes=[pltpu.VMEM((C_in, d), x.dtype)],               # causal carry
        ),
        compiler_params=pltpu.CompilerParams(
            dimension_semantics=("parallel", "arbitrary")),
    )(x, w_fused, b_fused)
    return out


def reference(x, wf, bf, wg, bg, dilation):
    """Pure-JAX reference matching GatedConv1d.forward (label=None)."""
    d = dilation
    xpad = jnp.pad(x, ((0, 0), (0, 0), (d, 0)))
    dn = ("NCH", "OIH", "NCH")

    def conv(w):
        return lax.conv_general_dilated(xpad, w, (1,), "VALID",
                                        rhs_dilation=(d,), dimension_numbers=dn,
                                        precision=lax.Precision.HIGHEST)

    f = conv(wf) + bf[None, :, None]
    g = conv(wg) + bg[None, :, None]
    return jnp.tanh(f) * jax.nn.sigmoid(g)


if __name__ == "__main__":
    def run_case(key, B, C_in, C_out, T, dilation, t_tile=None):
        ks = jax.random.split(key, 5)
        rnd = lambda k, s, sc=0.1: sc * jax.random.normal(k, s, jnp.float32)
        wf = rnd(ks[0], (C_out, C_in, 2))
        bf = rnd(ks[1], (C_out,))
        wg = rnd(ks[2], (C_out, C_in, 2))
        bg = rnd(ks[3], (C_out,))
        x = rnd(ks[4], (B, C_in, T), 1.0)

        out = gated_conv1d(x, wf, bf, wg, bg, dilation, t_tile=t_tile)
        jax.block_until_ready(out)

        ref = reference(x, wf, bf, wg, bg, dilation)
        assert out.shape == ref.shape, (out.shape, ref.shape)
        err = float(jnp.max(jnp.abs(out - ref)))
        assert jnp.allclose(out, ref, atol=2e-4, rtol=2e-4), err

    k1, k2 = jax.random.split(jax.random.PRNGKey(0))
    # Small shapes consistent with the module (kernel_size=2 WaveNet usage).
    run_case(k1, B=2, C_in=32, C_out=32, T=16, dilation=2)
    # Tiled path: several time tiles, dilation larger than one tile (exercises
    # the in-kernel causal carry across grid steps).
    run_case(k2, B=2, C_in=32, C_out=64, T=512, dilation=256, t_tile=128)

    print("KERNEL_OK")
</pallas_src>

<mosaic_0001>
module attributes {stable_mosaic.version = 11 : i64} {
  func.func @gated_conv1d_kernel(%arg0: i32, %arg1: i32, %arg2: memref<1x32x16xf32, #tpu.memory_space<vmem>>, %arg3: memref<64x64xf32, #tpu.memory_space<vmem>>, %arg4: memref<64x1xf32, #tpu.memory_space<vmem>>, %arg5: memref<1x32x16xf32, #tpu.memory_space<vmem>>, %arg6: memref<32x2xf32, #tpu.memory_space<vmem>>) attributes {dimension_semantics = [#tpu.dimension_semantics<parallel>, #tpu.dimension_semantics<arbitrary>], iteration_bounds = array<i64: 2, 1>, scalar_prefetch = 0 : i64, scratch_operands = 1 : i64, tpu.core_type = #tpu.core_type<tc>, window_params = [{transform_indices = @transform_0, window_bounds = array<i64: 1, 32, 16>}, {pipeline_mode = #tpu.pipeline_mode<synchronous>, transform_indices = @transform_1, window_bounds = array<i64: 64, 64>}, {pipeline_mode = #tpu.pipeline_mode<synchronous>, transform_indices = @transform_2, window_bounds = array<i64: 64, 1>}, {transform_indices = @transform_3, window_bounds = array<i64: 1, 32, 16>}]} {
    %c0_i32 = arith.constant 0 : i32
    %0 = arith.cmpi eq, %arg1, %c0_i32 : i32
    %1 = arith.extui %0 : i1 to i32
    %c0_i32_0 = arith.constant 0 : i32
    %2 = arith.cmpi ne, %1, %c0_i32_0 : i32
    scf.if %2 {
      %cst_15 = arith.constant 0.000000e+00 : f32
      %28 = vector.broadcast %cst_15 : f32 to vector<32x2xf32>
      %c0_16 = arith.constant 0 : index
      %c0_17 = arith.constant 0 : index
      %29 = vector.load %arg6[%c0_16, %c0_17] : memref<32x2xf32, #tpu.memory_space<vmem>>, vector<32x2xf32>
      tpu.vector_store %arg6[%c0_16, %c0_17], %28 {strides = array<i32>} : memref<32x2xf32, #tpu.memory_space<vmem>>, vector<32x2xf32>,
    } else {
    }
    %c0 = arith.constant 0 : index
    %c0_1 = arith.constant 0 : index
    %c0_2 = arith.constant 0 : index
    %3 = vector.load %arg2[%c0, %c0_1, %c0_2] : memref<1x32x16xf32, #tpu.memory_space<vmem>>, vector<1x32x16xf32>
    %4 = vector.shape_cast %3 : vector<1x32x16xf32> to vector<32x16xf32>
    %c0_3 = arith.constant 0 : index
    %c0_4 = arith.constant 0 : index
    %5 = vector.load %arg6[%c0_3, %c0_4] : memref<32x2xf32, #tpu.memory_space<vmem>>, vector<32x2xf32>
    %6 = tpu.concatenate %5, %4 in 1 : vector<32x2xf32>, vector<32x16xf32> -> vector<32x18xf32>
    %7 = vector.extract_strided_slice %6 {offsets = [0, 0], sizes = [32, 16], strides = [1, 1]} : vector<32x18xf32> to vector<32x16xf32>
    %8 = vector.extract_strided_slice %6 {offsets = [0, 16], sizes = [32, 2], strides = [1, 1]} : vector<32x18xf32> to vector<32x2xf32>
    %c0_5 = arith.constant 0 : index
    %c0_6 = arith.constant 0 : index
    %9 = vector.load %arg6[%c0_5, %c0_6] : memref<32x2xf32, #tpu.memory_space<vmem>>, vector<32x2xf32>
    tpu.vector_store %arg6[%c0_5, %c0_6], %8 {strides = array<i32>} : memref<32x2xf32, #tpu.memory_space<vmem>>, vector<32x2xf32>,
    %10 = tpu.concatenate %7, %4 in 0 : vector<32x16xf32>, vector<32x16xf32> -> vector<64x16xf32>
    %c0_7 = arith.constant 0 : index
    %c0_8 = arith.constant 0 : index
    %11 = vector.load %arg3[%c0_7, %c0_8] : memref<64x64xf32, #tpu.memory_space<vmem>>, vector<64x64xf32>
    %cst = arith.constant dense<0.000000e+00> : vector<64x16xf32>
    %12 = tpu.matmul %11, %10, %cst {dimension_numbers = #tpu.dot_dimension_numbers<[1], [0], [0], [1], [0, 0, 1, 1], [], []>} : vector<64x64xf32>, vector<64x16xf32>, vector<64x16xf32> -> vector<64x16xf32>
    %c0_9 = arith.constant 0 : index
    %c0_10 = arith.constant 0 : index
    %13 = vector.load %arg4[%c0_9, %c0_10] : memref<64x1xf32, #tpu.memory_space<vmem>>, vector<64x1xf32>
    %14 = vector.broadcast %13 : vector<64x1xf32> to vector<64x16xf32>
    %15 = arith.addf %12, %14 : vector<64x16xf32>
    %16 = vector.extract_strided_slice %15 {offsets = [0, 0], sizes = [32, 16], strides = [1, 1]} : vector<64x16xf32> to vector<32x16xf32>
    %17 = vector.extract_strided_slice %15 {offsets = [32, 0], sizes = [32, 16], strides = [1, 1]} : vector<64x16xf32> to vector<32x16xf32>
    %18 = math.tanh %16 : vector<32x16xf32>
    %19 = arith.negf %17 : vector<32x16xf32>
    %20 = math.exp %19 : vector<32x16xf32>
    %cst_11 = arith.constant 1.000000e+00 : f32
    %21 = vector.broadcast %cst_11 : f32 to vector<32x16xf32>
    %22 = arith.addf %21, %20 : vector<32x16xf32>
    %23 = arith.divf %21, %22 : vector<32x16xf32>
    %24 = arith.mulf %18, %23 : vector<32x16xf32>
    %c0_12 = arith.constant 0 : index
    %c0_13 = arith.constant 0 : index
    %c0_14 = arith.constant 0 : index
    %25 = vector.load %arg5[%c0_12, %c0_13, %c0_14] : memref<1x32x16xf32, #tpu.memory_space<vmem>>, vector<1x32x16xf32>
    %26 = vector.shape_cast %25 : vector<1x32x16xf32> to vector<32x16xf32>
    %27 = vector.shape_cast %24 : vector<32x16xf32> to vector<1x32x16xf32>
    tpu.vector_store %arg5[%c0_12, %c0_13, %c0_14], %27 {strides = array<i32>} : memref<1x32x16xf32, #tpu.memory_space<vmem>>, vector<1x32x16xf32>,
    return
  }
  func.func @transform_0(%arg0: i32, %arg1: i32) -> (i32, i32, i32) {
    %c0_i32 = arith.constant 0 : i32
    %c0_i32_0 = arith.constant 0 : i32
    return %arg0, %c0_i32, %arg1 : i32, i32, i32
  }
  func.func @transform_1(%arg0: i32, %arg1: i32) -> (i32, i32) {
    %c0_i32 = arith.constant 0 : i32
    %c0_i32_0 = arith.constant 0 : i32
    %c0_i32_1 = arith.constant 0 : i32
    return %c0_i32, %c0_i32_0 : i32, i32
  }
  func.func @transform_2(%arg0: i32, %arg1: i32) -> (i32, i32) {
    %c0_i32 = arith.constant 0 : i32
    %c0_i32_0 = arith.constant 0 : i32
    %c0_i32_1 = arith.constant 0 : i32
    return %c0_i32, %c0_i32_0 : i32, i32
  }
  func.func @transform_3(%arg0: i32, %arg1: i32) -> (i32, i32, i32) {
    %c0_i32 = arith.constant 0 : i32
    %c0_i32_0 = arith.constant 0 : i32
    return %arg0, %c0_i32, %arg1 : i32, i32, i32
  }
}

</mosaic_0001>

<llo_original>
// kernel: tpu_custom_call.1
$region0: #{tpu_custom_call.1}
  #allocation0 [shape = 'u32[]', space=smem, size = 0x4, offset = 0x4, fixed_abs, tag = 'smem constant byte address 0x4 - core index']
  #allocation1 [shape = 'u32[72,128]{1,0:T(1,128)}', space=vmem, size = 0x9000, scoped, tag = 'internal scratch']
  #allocation2 [shape = 'f32[32,2]{1,0:T(8,128)}', space=vmem, size = 0x4000, scoped, tag = 'scratch operand']
  %s0 = inlined_call_operand.vmem [shape: f32[2,32,16], index: 0, kind: input, shape index: {}]
  %s1 = inlined_call_operand.vmem [shape: f32[64,64], index: 1, kind: input, shape index: {}]
  %s2 = inlined_call_operand.vmem [shape: f32[64,1], index: 2, kind: input, shape index: {}]
  %s3 = inlined_call_operand.vmem [shape: f32[2,32,16], index: 3, kind: output, shape index: {}]
  %s4 = sld [smem:[#allocation0]]
  $region49: #{tpu_custom_call.1} parent=0
    _
  %s6 = ssub.s32 1, %s4
  %s7 = scalar_select 0, %s6, %s4
  loop: start=0, step=1, limit=4
  $region2: #{tpu_custom_call.1} parent=0 // loop_pre_header
    _
  $region3: #{tpu_custom_call.1} parent=0 // loop_header
    %s9 = sphi 0, %s13
    %p10 = scmp.ge.s32.totalorder %s9, 4
    %s16 = sphi 0, %s28
    %s17 = sphi 0, %s24
    %s18 = sphi 0, %s16
    %s19 = sphi 0, %s17
    %s20 = sphi 0, %s18
    %s21 = sphi 0, %s19
    %s33 = sphi 0, %s35
    %s36 = sphi 0, %s33
    %s37 = sphi 0, %s36
    %s53 = sphi 0, %s37
    %s57 = sphi 0, %s57
    %s59 = sphi 0, %s57
    %s60 = sphi 0, %s59
    %s74 = sphi 0, %s60
    %s78 = sphi 0, %s78
    %s80 = sphi 0, %s78
    %s81 = sphi 0, %s80
    %s95 = sphi 0, %s81
    %s103 = sphi 0, %s105
    %s106 = sphi 0, %s103
    %s107 = sphi 0, %s106
    %s123 = sphi 0, %s107
  $region4: #{tpu_custom_call.1} parent=0 // loop_header_branch
    %12 = sbr.rel (%p10) target = $region8
  $region5: #{tpu_custom_call.1} parent=0 // loop_body
    %s14 = ssub.s32 %s9, 1
    %s15 = ssub.s32 %s9, 2
    %s22 = sadd.s32 1, %s17
    %p23 = scmp.ge.s32.totalorder %s22, 1
    %s24 = scalar_select %p23, 0, %s22
    %s25 = sadd.s32 1, %s16
    %s26 = scalar_select %p23, %s25, %s16
    %p27 = scmp.ge.s32.totalorder %s26, 2
    %s28 = scalar_select %p27, 0, %s26
    %s29 = ssub.s32 %s16, %s28
    %s30 = ssub.s32 %s17, %s24
    %s31 = sor.u32 %s29, %s30
    %p32 = scmp.eq.s32.totalorder %s31, 0
    %s34 = sadd.s32 %s33, 1
    %s35 = scalar_select %p32, %s33, %s34
    %p38 = pneg %p32
    %p39 = scmp.eq.s32.totalorder %s9, 1
    %p40 = por %p38, %p39
    %p41 = scmp.ne.s32.totalorder %s33, %s36
    %p42 = scmp.eq.s32.totalorder %s9, 0
    %p43 = por %p41, %p42
    %p44 = scmp.ne.s32.totalorder %s33, %s36
    %p45 = scmp.eq.s32.totalorder %s14, 1
    %p46 = por %p44, %p45
    %p47 = scmp.ne.s32.totalorder %s36, %s37
    %p48 = scmp.eq.s32.totalorder %s14, 0
    %p49 = por %p47, %p48
    %p50 = scmp.ne.s32.totalorder %s36, %s37
    %p51 = scmp.eq.s32.totalorder %s15, 1
    %p52 = por %p50, %p51
    %p54 = scmp.ne.s32.totalorder %s37, %s53
    %p55 = scmp.eq.s32.totalorder %s15, 0
    %p56 = por %p54, %p55
    %s58 = sadd.s32 %s57, 1
    %p61 = scmp.eq.s32.totalorder %s9, 1
    %p62 = scmp.ne.s32.totalorder %s57, %s59
    %p63 = scmp.eq.s32.totalorder %s9, 0
    %p64 = por %p62, %p63
    %p65 = scmp.ne.s32.totalorder %s57, %s59
    %p66 = scmp.eq.s32.totalorder %s14, 1
    %p67 = por %p65, %p66
    %p68 = scmp.ne.s32.totalorder %s59, %s60
    %p69 = scmp.eq.s32.totalorder %s14, 0
    %p70 = por %p68, %p69
    %p71 = scmp.ne.s32.totalorder %s59, %s60
    %p72 = scmp.eq.s32.totalorder %s15, 1
    %p73 = por %p71, %p72
    %p75 = scmp.ne.s32.totalorder %s60, %s74
    %p76 = scmp.eq.s32.totalorder %s15, 0
    %p77 = por %p75, %p76
    %s79 = sadd.s32 %s78, 1
    %p82 = scmp.eq.s32.totalorder %s9, 1
    %p83 = scmp.ne.s32.totalorder %s78, %s80
    %p84 = scmp.eq.s32.totalorder %s9, 0
    %p85 = por %p83, %p84
    %p86 = scmp.ne.s32.totalorder %s78, %s80
    %p87 = scmp.eq.s32.totalorder %s14, 1
    %p88 = por %p86, %p87
    %p89 = scmp.ne.s32.totalorder %s80, %s81
    %p90 = scmp.eq.s32.totalorder %s14, 0
    %p91 = por %p89, %p90
    %p92 = scmp.ne.s32.totalorder %s80, %s81
    %p93 = scmp.eq.s32.totalorder %s15, 1
    %p94 = por %p92, %p93
    %p96 = scmp.ne.s32.totalorder %s81, %s95
    %p97 = scmp.eq.s32.totalorder %s15, 0
    %p98 = por %p96, %p97
    %s99 = ssub.s32 %s16, %s28
    %s100 = ssub.s32 %s17, %s24
    %s101 = sor.u32 %s99, %s100
    %p102 = scmp.eq.s32.totalorder %s101, 0
    %s104 = sadd.s32 %s103, 1
    %s105 = scalar_select %p102, %s103, %s104
    %p108 = pneg %p102
    %p109 = scmp.eq.s32.totalorder %s9, 1
    %p110 = por %p108, %p109
    %p111 = scmp.ne.s32.totalorder %s103, %s106
    %p112 = scmp.eq.s32.totalorder %s9, 0
    %p113 = por %p111, %p112
    %p114 = scmp.ne.s32.totalorder %s103, %s106
    %p115 = scmp.eq.s32.totalorder %s14, 1
    %p116 = por %p114, %p115
    %p117 = scmp.ne.s32.totalorder %s106, %s107
    %p118 = scmp.eq.s32.totalorder %s14, 0
    %p119 = por %p117, %p118
    %p120 = scmp.ne.s32.totalorder %s106, %s107
    %p121 = scmp.eq.s32.totalorder %s15, 1
    %p122 = por %p120, %p121
    %p124 = scmp.ne.s32.totalorder %s107, %s123
    %p125 = scmp.eq.s32.totalorder %s15, 0
    %p126 = por %p124, %p125
    %p127 = scmp.le.s32.totalorder 1, %s9
    %p128 = scmp.lt.s32.totalorder %s9, 3
    %p129 = pnand %p127, %p128
    %p130 = pneg %p129
    // Predicated region
    $region9: #{tpu_custom_call.1} parent=5 // pred_check
      _
    $region10: #{tpu_custom_call.1} parent=5 // pred_check_branch
      %132 = sbr.rel (%p129) target = $region12
    $region11: #{tpu_custom_call.1} parent=5 // pred_region
      %s133 = ssub.s32 %s9, 1
      // Predicated region
      $region13: #{tpu_custom_call.1} parent=11 // pred_check
        %p134 = pneg %p70
      $region14: #{tpu_custom_call.1} parent=11 // pred_check_branch
        %136 = sbr.rel (%p134) target = $region16
      $region15: #{tpu_custom_call.1} parent=11 // pred_region
        _
      $region16: #{tpu_custom_call.1} parent=11 // pred_fallthru
        _
      // Predicated region
      $region17: #{tpu_custom_call.1} parent=11 // pred_check
        %p137 = pneg %p91
      $region18: #{tpu_custom_call.1} parent=11 // pred_check_branch
        %139 = sbr.rel (%p137) target = $region20
      $region19: #{tpu_custom_call.1} parent=11 // pred_region
        _
      $region20: #{tpu_custom_call.1} parent=11 // pred_fallthru
        _
    $region12: #{tpu_custom_call.1} parent=5 // pred_fallthru
      _
    %p140 = scmp.lt.s32.totalorder %s9, 2
    // Predicated region
    $region21: #{tpu_custom_call.1} parent=5 // pred_check
      %p141 = pneg %p140
    $region22: #{tpu_custom_call.1} parent=5 // pred_check_branch
      %143 = sbr.rel (%p141) target = $region24
    $region23: #{tpu_custom_call.1} parent=5 // pred_region
      // Predicated region
      $region25: #{tpu_custom_call.1} parent=23 // pred_check
        %p144 = pneg %p43
      $region26: #{tpu_custom_call.1} parent=23 // pred_check_branch
        %146 = sbr.rel (%p144) target = $region28
      $region27: #{tpu_custom_call.1} parent=23 // pred_region
        %p147 = scmp.lt.s32.totalorder %s16, 1
        %s148 = scalar_select %p147, %s16, 1
        %p149 = scmp.lt.s32.totalorder %s17, 0
        %s150 = scalar_select %p149, %s17, 0
        %s151 = smul.addr %s148, 4
        %s152 = sadd.s32 %s150, %s151
        %s153 = smul.addr %s152, 8
        %s154 = scalar_lea.vmem %s0, %s153
      $region28: #{tpu_custom_call.1} parent=23 // pred_fallthru
        _
    $region24: #{tpu_custom_call.1} parent=5 // pred_fallthru
      _
    %p155 = scmp.le.s32.totalorder 1, %s9
    %p156 = scmp.lt.s32.totalorder %s9, 3
    %p157 = pnand %p155, %p156
    %p158 = pneg %p157
    // Predicated region
    $region29: #{tpu_custom_call.1} parent=5 // pred_check
      _
    $region30: #{tpu_custom_call.1} parent=5 // pred_check_branch
      %160 = sbr.rel (%p157) target = $region32
    $region31: #{tpu_custom_call.1} parent=5 // pred_region
      %s161 = ssub.s32 %s9, 1
      %p162 = scmp.lt.s32.totalorder %s18, 1
      %s163 = scalar_select %p162, %s18, 1
      %p164 = scmp.lt.s32.totalorder %s19, 0
      %s165 = scalar_select %p164, %s19, 0
      %s166 = smul.addr %s163, 4
      %s167 = sadd.s32 %s165, %s166
      %s168 = smul.addr %s167, 8
      %s169 = scalar_lea.vmem %s0, %s168
      %p170 = pneg %p49
      %p171 = pneg %p46
      %p172 = pneg %p70
      %p173 = pneg %p67
      %p174 = pneg %p91
      %p175 = pneg %p88
      %p176 = pneg %p119
      %p177 = pneg %p116
      %p178 = scmp.lt.s32.totalorder %s18, 1
      %s179 = scalar_select %p178, %s18, 1
      %p180 = scmp.lt.s32.totalorder %s19, 0
      %s181 = scalar_select %p180, %s19, 0
      %s182 = smul.addr %s179, 4
      %s183 = sadd.s32 %s181, %s182
      %s184 = smul.addr %s183, 8
      %s185 = scalar_lea.vmem %s3, %s184
      %p186 = scmp.lt.s32.totalorder %s18, 1
      %s187 = scalar_select %p186, %s18, 1
      %p188 = scmp.lt.s32.totalorder %s19, 0
      %s189 = scalar_select %p188, %s19, 0
      %s190 = smul.addr %s187, 4
      %s191 = sadd.s32 %s189, %s190
      %s192 = smul.addr %s191, 8
      %s193 = scalar_lea.vmem %s0, %s192
      %p194 = scmp.lt.s32.totalorder %s18, 1
      %s195 = scalar_select %p194, %s18, 1
      %p196 = scmp.lt.s32.totalorder %s19, 0
      %s197 = scalar_select %p196, %s19, 0
      %s198 = smul.addr %s195, 4
      %s199 = sadd.s32 %s197, %s198
      %s200 = smul.addr %s199, 8
      %s201 = scalar_lea.vmem %s3, %s200
      %p202 = scmp.eq.s32.totalorder %s19, 0
      // Predicated region
      $region33: #{tpu_custom_call.1} parent=31 // pred_check
        %p203 = pneg %p202
      $region34: #{tpu_custom_call.1} parent=31 // pred_check_branch
        %205 = sbr.rel (%p203) target = $region36
      $region35: #{tpu_custom_call.1} parent=31 // pred_region
        %vm206 = vcmask 15360
        %207 = vst.msk [vmem:[#allocation2] sm:$0xff] %vm206, 0.0
        %208 = vst.msk [vmem:[#allocation2 + $0x8] sm:$0xff] %vm206, 0.0
        %209 = vst.msk [vmem:[#allocation2 + $0x10] sm:$0xff] %vm206, 0.0
        %210 = vst.msk [vmem:[#allocation2 + $0x18] sm:$0xff] %vm206, 0.0
      $region36: #{tpu_custom_call.1} parent=31 // pred_fallthru
        _
      %v211 = vld [vmem:[%s193] sm:$0xff]
      %v212 = vld [vmem:[%s193 + $0x8] sm:$0xff]
      %v213 = vld [vmem:[%s193 + $0x10] sm:$0xff]
      %v214 = vld [vmem:[%s193 + $0x18] sm:$0xff]
      %v215 = vld [vmem:[#allocation2] sm:$0xff]
      %v216 = vld [vmem:[#allocation2 + $0x8] sm:$0xff]
      %v217 = vld [vmem:[#allocation2 + $0x10] sm:$0xff]
      %v218 = vld [vmem:[#allocation2 + $0x18] sm:$0xff]
      %223 = vrot.lane.b32.xlu0 %v211, 2
      %v224 = vpop.permute.xlu0 %223
      %225 = vrot.lane.b32.xlu0 %v212, 2
      %v226 = vpop.permute.xlu0 %225
      %227 = vrot.lane.b32.xlu0 %v213, 2
      %v228 = vpop.permute.xlu0 %227
      %229 = vrot.lane.b32.xlu0 %v214, 2
      %v230 = vpop.permute.xlu0 %229
      %vm235 = vcmask 15360
      %v236 = vsel %vm235, %v215, %v224
      %v237 = vsel %vm235, %v216, %v226
      %v238 = vsel %vm235, %v217, %v228
      %v239 = vsel %vm235, %v218, %v230
      %244 = vrot.lane.b32.xlu0 %v236, 112
      %v245 = vpop.permute.xlu0 %244
      %246 = vrot.lane.b32.xlu0 %v237, 112
      %v247 = vpop.permute.xlu0 %246
      %248 = vrot.lane.b32.xlu0 %v238, 112
      %v249 = vpop.permute.xlu0 %248
      %250 = vrot.lane.b32.xlu0 %v239, 112
      %v251 = vpop.permute.xlu0 %250
      %256 = vst.msk [vmem:[#allocation2] sm:$0xff] %vm235, %v245
      %257 = vst.msk [vmem:[#allocation2 + $0x8] sm:$0xff] %vm235, %v247
      %258 = vst.msk [vmem:[#allocation2 + $0x10] sm:$0xff] %vm235, %v249
      %259 = vst.msk [vmem:[#allocation2 + $0x18] sm:$0xff] %vm235, %v251
      %v260 = vld [vmem:[%s1] sm:$0xff]
      %v261 = vld [vmem:[%s1 + $0x8] sm:$0xff]
      %v262 = vld [vmem:[%s1 + $0x10] sm:$0xff]
      %v263 = vld [vmem:[%s1 + $0x18] sm:$0xff]
      %v264 = vld [vmem:[%s1 + $0x20] sm:$0xff]
      %v265 = vld [vmem:[%s1 + $0x28] sm:$0xff]
      %v266 = vld [vmem:[%s1 + $0x30] sm:$0xff]
      %v267 = vld [vmem:[%s1 + $0x38] sm:$0xff]
      %v268 = vld [vmem:[%s2] sm:$0xff]
      %v269 = vld [vmem:[%s2 + $0x8] sm:$0xff]
      %v270 = vld [vmem:[%s2 + $0x10] sm:$0xff]
      %v271 = vld [vmem:[%s2 + $0x18] sm:$0xff]
      %v272 = vld [vmem:[%s2 + $0x20] sm:$0xff]
      %v273 = vld [vmem:[%s2 + $0x28] sm:$0xff]
      %v274 = vld [vmem:[%s2 + $0x30] sm:$0xff]
      %v275 = vld [vmem:[%s2 + $0x38] sm:$0xff]
      %277 = vset.pattern.permute.xlu0 0
      %278 = vperm.xlu0 %277, %v268
      %v279 = vpop.permute.xlu0 %278
      %282 = vset.pattern.permute.xlu0 0
      %283 = vperm.xlu0 %282, %v269
      %v284 = vpop.permute.xlu0 %283
      %287 = vset.pattern.permute.xlu0 0
      %288 = vperm.xlu0 %287, %v270
      %v289 = vpop.permute.xlu0 %288
      %292 = vset.pattern.permute.xlu0 0
      %293 = vperm.xlu0 %292, %v271
      %v294 = vpop.permute.xlu0 %293
      %297 = vset.pattern.permute.xlu0 0
      %298 = vperm.xlu0 %297, %v272
      %v299 = vpop.permute.xlu0 %298
      %302 = vset.pattern.permute.xlu0 0
      %303 = vperm.xlu0 %302, %v273
      %v304 = vpop.permute.xlu0 %303
      %307 = vset.pattern.permute.xlu0 0
      %308 = vperm.xlu0 %307, %v274
      %v309 = vpop.permute.xlu0 %308
      %312 = vset.pattern.permute.xlu0 0
      %313 = vperm.xlu0 %312, %v275
      %v314 = vpop.permute.xlu0 %313
      %vm316 = vcmask 523264
      %v318 = vsel %vm316, %v260, 0
      %v321 = vsel %vm316, %v261, 0
      %v324 = vsel %vm316, %v262, 0
      %v327 = vsel %vm316, %v263, 0
      %v330 = vsel %vm316, %v264, 0
      %v333 = vsel %vm316, %v265, 0
      %v336 = vsel %vm316, %v266, 0
      %v339 = vsel %vm316, %v267, 0
      %341 = vmatpush.msra.mxu0 0.0
      %342 = vmatpush.msra.mxu0 0.0
      %343 = vmatpush.msra.mxu0 0.0
      %344 = vmatpush.msra.mxu0 0.0
      %345 = vmatpush.msra.mxu0 0.0
      %346 = vmatpush.msra.mxu0 0.0
      %347 = vmatpush.msra.mxu0 0.0
      %348 = vmatpush.msra.mxu0 0.0
      %349 = vmatpush.msra.mxu0 %v214
      %350 = vmatpush.msra.mxu0 %v213
      %351 = vmatpush.msra.mxu0 %v212
      %352 = vmatpush.msra.mxu0 %v211
      %353 = vmatpush.msra.mxu0 %v239
      %354 = vmatpush.msra.mxu0 %v238
      %355 = vmatpush.msra.mxu0 %v237
      %356 = vmatpush.msra.mxu0 %v236
      %357 = vmatmul.f32.gmra.mxu0 %v318
      %v358 = vpop.f32.mrf.mxu0
      %v359 = vadd.f32 %v279, %v358
      %360 = vmatmul.f32.gmra.mxu0 %v321
      %v361 = vpop.f32.mrf.mxu0
      %v362 = vadd.f32 %v284, %v361
      %363 = vmatmul.f32.gmra.mxu0 %v324
      %v364 = vpop.f32.mrf.mxu0
      %v365 = vadd.f32 %v289, %v364
      %366 = vmatmul.f32.gmra.mxu0 %v327
      %v367 = vpop.f32.mrf.mxu0
      %v368 = vadd.f32 %v294, %v367
      %369 = vmatmul.f32.gmra.mxu0 %v330
      %v370 = vpop.f32.mrf.mxu0
      %v371 = vadd.f32 %v299, %v370
      %372 = vmatmul.f32.gmra.mxu0 %v333
      %v373 = vpop.f32.mrf.mxu0
      %v374 = vadd.f32 %v304, %v373
      %375 = vmatmul.f32.gmra.mxu0 %v336
      %v376 = vpop.f32.mrf.mxu0
      %v377 = vadd.f32 %v309, %v376
      %378 = vmatmul.f32.gmra.mxu0 %v339
      %v379 = vpop.f32.mrf.mxu0
      %v380 = vadd.f32 %v314, %v379
      %381 = vdwg.mxu0
      %v382 = vtanh.pop %v359
      %v383 = vtanh.pop %v362
      %v384 = vtanh.pop %v365
      %v385 = vtanh.pop %v368
      %v386 = vxor.u32 %v371, 2147483648
      %v387 = vxor.u32 %v374, 2147483648
      %v388 = vxor.u32 %v377, 2147483648
      %v389 = vxor.u32 %v380, 2147483648
      %v390 = vmul.f32 %v386, 1.442695
      %v391 = vpow.pop %v390
      %v392 = vmul.f32 %v387, 1.442695
      %v393 = vpow.pop %v392
      %v394 = vmul.f32 %v388, 1.442695
      %v395 = vpow.pop %v394
      %v396 = vmul.f32 %v389, 1.442695
      %v397 = vpow.pop %v396
      %v398 = vadd.f32 %v391, 1.0
      %v399 = vadd.f32 %v393, 1.0
      %v400 = vadd.f32 %v395, 1.0
      %v401 = vadd.f32 %v397, 1.0
      %v402 = vrcp.pop %v398
      %v403 = vmul.f32 %v398, %v402
      %v404 = vsub.f32 1.0, %v403
      %v405 = vmul.f32 %v402, %v404
      %v406 = vadd.f32 %v402, %v405
      %vm407 = vweird.f32 %v398
      %vm408 = vweird.f32 %v402
      %vm409 = vmor %vm407, %vm408
      %v410 = vsel %vm409, %v402, %v406
      %v411 = vand.u32 2147483647, %v398
      %vm412 = vcmp.eq.f32.partialorder %v411, 8.507059e+37
      %v413 = vand.u32 %v398, 2147483648
      %v414 = vor.u32 1.1754944e-38, %v413
      %v415 = vsel %vm412, %v414, %v410
      %v416 = vmul.f32 1.0, %v415
      %v417 = vrcp.pop %v399
      %v418 = vmul.f32 %v399, %v417
      %v419 = vsub.f32 1.0, %v418
      %v420 = vmul.f32 %v417, %v419
      %v421 = vadd.f32 %v417, %v420
      %vm422 = vweird.f32 %v399
      %vm423 = vweird.f32 %v417
      %vm424 = vmor %vm422, %vm423
      %v425 = vsel %vm424, %v417, %v421
      %v426 = vand.u32 2147483647, %v399
      %vm427 = vcmp.eq.f32.partialorder %v426, 8.507059e+37
      %v428 = vand.u32 %v399, 2147483648
      %v429 = vor.u32 1.1754944e-38, %v428
      %v430 = vsel %vm427, %v429, %v425
      %v431 = vmul.f32 1.0, %v430
      %v432 = vrcp.pop %v400
      %v433 = vmul.f32 %v400, %v432
      %v434 = vsub.f32 1.0, %v433
      %v435 = vmul.f32 %v432, %v434
      %v436 = vadd.f32 %v432, %v435
      %vm437 = vweird.f32 %v400
      %vm438 = vweird.f32 %v432
      %vm439 = vmor %vm437, %vm438
      %v440 = vsel %vm439, %v432, %v436
      %v441 = vand.u32 2147483647, %v400
      %vm442 = vcmp.eq.f32.partialorder %v441, 8.507059e+37
      %v443 = vand.u32 %v400, 2147483648
      %v444 = vor.u32 1.1754944e-38, %v443
      %v445 = vsel %vm442, %v444, %v440
      %v446 = vmul.f32 1.0, %v445
      %v447 = vrcp.pop %v401
      %v448 = vmul.f32 %v401, %v447
      %v449 = vsub.f32 1.0, %v448
      %v450 = vmul.f32 %v447, %v449
      %v451 = vadd.f32 %v447, %v450
      %vm452 = vweird.f32 %v401
      %vm453 = vweird.f32 %v447
      %vm454 = vmor %vm452, %vm453
      %v455 = vsel %vm454, %v447, %v451
      %v456 = vand.u32 2147483647, %v401
      %vm457 = vcmp.eq.f32.partialorder %v456, 8.507059e+37
      %v458 = vand.u32 %v401, 2147483648
      %v459 = vor.u32 1.1754944e-38, %v458
      %v460 = vsel %vm457, %v459, %v455
      %v461 = vmul.f32 1.0, %v460
      %v462 = vmul.f32 %v382, %v416
      %v463 = vmul.f32 %v383, %v431
      %v464 = vmul.f32 %v384, %v446
      %v465 = vmul.f32 %v385, %v461
      %vm466 = vcmask 130048
      %467 = vst.msk [vmem:[%s201] sm:$0xff] %vm466, %v462
      %468 = vst.msk [vmem:[%s201 + $0x8] sm:$0xff] %vm466, %v463
      %469 = vst.msk [vmem:[%s201 + $0x10] sm:$0xff] %vm466, %v464
      %470 = vst.msk [vmem:[%s201 + $0x18] sm:$0xff] %vm466, %v465
      %p471 = scmp.lt.s32.totalorder %s18, 1
      %s472 = scalar_select %p471, %s18, 1
      %p473 = scmp.lt.s32.totalorder %s19, 0
      %s474 = scalar_select %p473, %s19, 0
      %s475 = smul.addr %s472, 4
      %s476 = sadd.s32 %s474, %s475
      %s477 = smul.addr %s476, 8
      %s478 = scalar_lea.vmem %s3, %s477
      // Predicated region
      $region37: #{tpu_custom_call.1} parent=31 // pred_check
        %p479 = pneg %p116
      $region38: #{tpu_custom_call.1} parent=31 // pred_check_branch
        %481 = sbr.rel (%p479) target = $region40
      $region39: #{tpu_custom_call.1} parent=31 // pred_region
        _
      $region40: #{tpu_custom_call.1} parent=31 // pred_fallthru
        _
    $region32: #{tpu_custom_call.1} parent=5 // pred_fallthru
      _
    %p482 = scmp.le.s32.totalorder 2, %s9
    // Predicated region
    $region41: #{tpu_custom_call.1} parent=5 // pred_check
      %p483 = pneg %p482
    $region42: #{tpu_custom_call.1} parent=5 // pred_check_branch
      %485 = sbr.rel (%p483) target = $region44
    $region43: #{tpu_custom_call.1} parent=5 // pred_region
      %s486 = ssub.s32 %s9, 2
      // Predicated region
      $region45: #{tpu_custom_call.1} parent=43 // pred_check
        %p487 = pneg %p122
      $region46: #{tpu_custom_call.1} parent=43 // pred_check_branch
        %489 = sbr.rel (%p487) target = $region48
      $region47: #{tpu_custom_call.1} parent=43 // pred_region
        %p490 = scmp.lt.s32.totalorder %s20, 1
        %s491 = scalar_select %p490, %s20, 1
        %p492 = scmp.lt.s32.totalorder %s21, 0
        %s493 = scalar_select %p492, %s21, 0
        %s494 = smul.addr %s491, 4
        %s495 = sadd.s32 %s493, %s494
        %s496 = smul.addr %s495, 8
        %s497 = scalar_lea.vmem %s3, %s496
      $region48: #{tpu_custom_call.1} parent=43 // pred_fallthru
        _
    $region44: #{tpu_custom_call.1} parent=5 // pred_fallthru
      _
  $region6: #{tpu_custom_call.1} parent=0 // loop_footer
    %s13 = sadd.s32 1, %s9
  $region7: #{tpu_custom_call.1} parent=0 // loop_footer_branch
    %8 = sbr.rel target = $region3
  $region8: #{tpu_custom_call.1} parent=0 // loop_exit
    _

</llo_original>
